<compile_context>
chip_gen: v7x
topology: tpu7x:2x2x1
jax: 0.10.0
libtpu: 0.0.40
codegen_flags: <defaults>
</compile_context>

<pallas_src>
import functools

import jax
import jax.numpy as jnp
import numpy as np
from jax.experimental import pallas as pl
from jax.experimental.pallas import tpu as pltpu

IN_DIM = 28 * 28          # 784
H1, H2 = 48, 24
OUT_DIM = 10
OUT_PAD = 128             # lane-dense padded output width (multiple of 128)
IN_PAD_LANES = 896        # ceil(784/128)*128: VMEM lane footprint of one x row

# Conservative budgets that are safe on every generation (v7x: 64 MiB physical VMEM).
VMEM_LIMIT_BYTES = 48 * 1024 * 1024
TILE_BUDGET_BYTES = 42 * 1024 * 1024   # headroom for resident weights + compiler scratch


def _round_up(n, m):
    return ((n + m - 1) // m) * m


def _mlp_kernel(x_ref, w1_ref, b1_ref, w2_ref, b2_ref, w3_ref, b3_ref, o_ref):
    # Fused 3-layer MLP for one (TB, 784) batch tile.
    # MXU matmuls with f32 accumulation; bias-add + ReLU in f32 on the VPU
    # (safe on v5e which has no bf16 VPU datapath).
    x = x_ref[...].astype(w1_ref.dtype)                                   # cast in-register
    h1 = jnp.dot(x, w1_ref[...], preferred_element_type=jnp.float32)     # (TB, 48)
    h1 = jnp.maximum(h1 + b1_ref[...], 0.0)
    h2 = jnp.dot(h1.astype(w2_ref.dtype), w2_ref[...],
                 preferred_element_type=jnp.float32)                     # (TB, 24)
    h2 = jnp.maximum(h2 + b2_ref[...], 0.0)
    out = jnp.dot(h2.astype(w3_ref.dtype), w3_ref[...],
                  preferred_element_type=jnp.float32)                    # (TB, 128)
    o_ref[...] = (out + b3_ref[...]).astype(o_ref.dtype)


def prepare_kernel_params(params, compute_dtype=jnp.float32):
    """One-time prep (hoisted out of the per-call path): transpose PyTorch Linear
    weights (out,in) -> (in,out), zero-pad the last layer to a lane-dense width,
    reshape biases to (1, N) and keep them in f32."""
    w1, b1, w2, b2, w3, b3 = params
    w1t = w1.T.astype(compute_dtype)                                      # (784, 48)
    w2t = w2.T.astype(compute_dtype)                                      # (48, 24)
    w3t = jnp.zeros((H2, OUT_PAD), compute_dtype)
    w3t = w3t.at[:, :OUT_DIM].set(w3.T.astype(compute_dtype))             # (24, 128)
    b1r = b1.reshape(1, H1).astype(jnp.float32)
    b2r = b2.reshape(1, H2).astype(jnp.float32)
    b3r = jnp.zeros((1, OUT_PAD), jnp.float32)
    b3r = b3r.at[:, :OUT_DIM].set(b3.astype(jnp.float32))                 # (1, 128)
    return (w1t, b1r, w2t, b2r, w3t, b3r)


def normalnet_forward(x, kernel_params, *, tb=None, out_dtype=jnp.float32,
                      return_padded=False):
    """x: (B, 1, 28, 28) or (B, 784), any float dtype (f32 or bf16), NCHW like PyTorch.
    kernel_params: output of prepare_kernel_params.
    return_padded=True returns the (B, 128) lane-padded logits (avoids a slice pass)."""
    w1t, b1r, w2t, b2r, w3t, b3r = kernel_params
    B = x.shape[0]
    x2d = x.reshape(B, -1)   # == torch x.view(x.size(0), -1); NO dtype conversion here
    assert x2d.shape[1] == IN_DIM

    x_bytes = jnp.dtype(x2d.dtype).itemsize
    o_bytes = jnp.dtype(out_dtype).itemsize

    # ---- batch-tile selection: biggest tile that fits the VMEM budget ----
    if tb is None:
        tb = 4096 if x_bytes >= 4 else 8192
    # double-buffered x tile (lane-padded to 896) + double-buffered output tile, per row
    bytes_per_row = 2 * (IN_PAD_LANES * x_bytes + OUT_PAD * o_bytes)
    tb = min(tb, max(8, (TILE_BUDGET_BYTES // bytes_per_row) // 8 * 8))
    tb = min(tb, _round_up(B, 8))                   # never exceed the batch
    tb = min(tb, _round_up(pl.cdiv(B, 2), 8))       # >= 2 grid steps (v7x megacore / overlap)
    tb = max(tb, 8)

    grid = (pl.cdiv(B, tb),)

    def const_spec(arr):
        # Weights / biases: block == full array, constant index_map ->
        # DMA'd once, resident in VMEM across all grid steps.
        return pl.BlockSpec(arr.shape, lambda i: (0,) * arr.ndim)

    param_bytes = sum(int(a.size) * a.dtype.itemsize for a in kernel_params)
    cost = pl.CostEstimate(
        flops=2 * B * (IN_DIM * H1 + H1 * H2 + H2 * OUT_PAD),
        transcendentals=0,
        bytes_accessed=B * (IN_DIM * x_bytes + OUT_PAD * o_bytes) + param_bytes,
    )

    out = pl.pallas_call(
        _mlp_kernel,
        out_shape=jax.ShapeDtypeStruct((B, OUT_PAD), out_dtype),
        grid=grid,
        in_specs=[
            pl.BlockSpec((tb, IN_DIM), lambda i: (i, 0)),   # streamed activation tile
            const_spec(w1t), const_spec(b1r),
            const_spec(w2t), const_spec(b2r),
            const_spec(w3t), const_spec(b3r),
        ],
        out_specs=pl.BlockSpec((tb, OUT_PAD), lambda i: (i, 0)),
        compiler_params=pltpu.CompilerParams(
            dimension_semantics=("parallel",),
            vmem_limit_bytes=VMEM_LIMIT_BYTES,
        ),
        cost_estimate=cost,
    )(x2d, w1t, b1r, w2t, b2r, w3t, b3r)

    if return_padded:
        return out            # (B, 128): columns 10..127 are exactly zero (+ b3 pad = 0)
    return out[:, :OUT_DIM]   # keep PyTorch (B, 10) semantics (costs one extra slice pass)


def init_params(key):
    """Deterministic PyTorch-style Linear init: U(-1/sqrt(fan_in), 1/sqrt(fan_in))."""
    dims = [(H1, IN_DIM), (H2, H1), (OUT_DIM, H2)]   # (out, in) per nn.Linear
    params = []
    keys = jax.random.split(key, 2 * len(dims))
    for i, (fan_out, fan_in) in enumerate(dims):
        bound = 1.0 / (fan_in ** 0.5)
        w = jax.random.uniform(keys[2 * i], (fan_out, fan_in),
                               minval=-bound, maxval=bound, dtype=jnp.float32)
        b = jax.random.uniform(keys[2 * i + 1], (fan_out,),
                               minval=-bound, maxval=bound, dtype=jnp.float32)
        params += [w, b]
    return tuple(params)


def _reference_forward_np(x, params):
    """Exact f32 reference in numpy (avoids TPU matmul-precision ambiguity)."""
    w1, b1, w2, b2, w3, b3 = [np.asarray(p, dtype=np.float32) for p in params]
    h = np.asarray(x, dtype=np.float32).reshape(x.shape[0], -1)
    h = np.maximum(h @ w1.T + b1, 0.0)
    h = np.maximum(h @ w2.T + b2, 0.0)
    return h @ w3.T + b3


if __name__ == "__main__":
    key = jax.random.PRNGKey(0)
    k_param, k_x, k_x2 = jax.random.split(key, 3)
    params = init_params(k_param)

    # --- f32 path, small MNIST-like batch: (B=2, C=1, H=28, W=28), NCHW ---
    kp_f32 = prepare_kernel_params(params, compute_dtype=jnp.float32)
    fwd_f32 = jax.jit(functools.partial(normalnet_forward, out_dtype=jnp.float32))
    x = jax.random.normal(k_x, (2, 1, 28, 28), dtype=jnp.float32)
    out = jax.block_until_ready(fwd_f32(x, kp_f32))
    ref = _reference_forward_np(x, params)
    assert out.shape == (2, OUT_DIM)
    assert np.allclose(np.asarray(out), ref, atol=5e-3, rtol=5e-3)

    # --- f32 path, multi-tile grid with a partial last block (B=1000, tb=256) ---
    xb = jax.random.normal(k_x2, (1000, 1, 28, 28), dtype=jnp.float32)
    fwd_f32_t = jax.jit(functools.partial(normalnet_forward, tb=256,
                                          out_dtype=jnp.float32))
    outb = jax.block_until_ready(fwd_f32_t(xb, kp_f32))
    refb = _reference_forward_np(xb, params)
    assert outb.shape == (1000, OUT_DIM)
    assert np.allclose(np.asarray(outb), refb, atol=5e-3, rtol=5e-3)

    # --- bf16 activation/weight path: x is provided ALREADY in bf16 (upstream),
    #     so the kernel's HBM read stream is genuinely halved; f32 accumulation ---
    kp_bf16 = prepare_kernel_params(params, compute_dtype=jnp.bfloat16)
    fwd_bf16 = jax.jit(functools.partial(normalnet_forward, out_dtype=jnp.float32))
    x_bf16 = x.astype(jnp.bfloat16)   # stands in for an upstream bf16 producer
    out_bf16 = jax.block_until_ready(fwd_bf16(x_bf16, kp_bf16))
    assert out_bf16.shape == (2, OUT_DIM)
    assert np.allclose(np.asarray(out_bf16), ref, atol=1e-1, rtol=1e-1)

    # --- padded + bf16-output path (no slice pass, halved output write stream) ---
    fwd_pad = jax.jit(functools.partial(normalnet_forward, out_dtype=jnp.bfloat16,
                                        return_padded=True))
    out_pad = jax.block_until_ready(fwd_pad(x, kp_f32))
    assert out_pad.shape == (2, OUT_PAD)
    assert np.allclose(np.asarray(out_pad[:, :OUT_DIM], dtype=np.float32),
                       ref, atol=1e-1, rtol=1e-1)
    assert np.all(np.asarray(out_pad[:, OUT_DIM:], dtype=np.float32) == 0.0)

    print("KERNEL_OK")
</pallas_src>

<mosaic_0001>
module attributes {stable_mosaic.version = 11 : i64} {
  func.func @_mlp_kernel(%arg0: i32, %arg1: memref<8x784xf32, #tpu.memory_space<vmem>>, %arg2: memref<784x48xf32, #tpu.memory_space<vmem>>, %arg3: memref<1x48xf32, #tpu.memory_space<vmem>>, %arg4: memref<48x24xf32, #tpu.memory_space<vmem>>, %arg5: memref<1x24xf32, #tpu.memory_space<vmem>>, %arg6: memref<24x128xf32, #tpu.memory_space<vmem>>, %arg7: memref<1x128xf32, #tpu.memory_space<vmem>>, %arg8: memref<8x128xf32, #tpu.memory_space<vmem>>) attributes {dimension_semantics = [#tpu.dimension_semantics<parallel>], iteration_bounds = array<i64: 1>, scalar_prefetch = 0 : i64, scratch_operands = 0 : i64, tpu.core_type = #tpu.core_type<tc>, window_params = [{transform_indices = @transform_0, window_bounds = array<i64: 8, 784>}, {pipeline_mode = #tpu.pipeline_mode<synchronous>, transform_indices = @transform_1, window_bounds = array<i64: 784, 48>}, {pipeline_mode = #tpu.pipeline_mode<synchronous>, transform_indices = @transform_2, window_bounds = array<i64: 1, 48>}, {pipeline_mode = #tpu.pipeline_mode<synchronous>, transform_indices = @transform_3, window_bounds = array<i64: 48, 24>}, {pipeline_mode = #tpu.pipeline_mode<synchronous>, transform_indices = @transform_4, window_bounds = array<i64: 1, 24>}, {pipeline_mode = #tpu.pipeline_mode<synchronous>, transform_indices = @transform_5, window_bounds = array<i64: 24, 128>}, {pipeline_mode = #tpu.pipeline_mode<synchronous>, transform_indices = @transform_6, window_bounds = array<i64: 1, 128>}, {transform_indices = @transform_7, window_bounds = array<i64: 8, 128>}]} {
    %c0 = arith.constant 0 : index
    %c0_0 = arith.constant 0 : index
    %0 = vector.load %arg1[%c0, %c0_0] : memref<8x784xf32, #tpu.memory_space<vmem>>, vector<8x784xf32>
    %c0_1 = arith.constant 0 : index
    %c0_2 = arith.constant 0 : index
    %1 = vector.load %arg2[%c0_1, %c0_2] : memref<784x48xf32, #tpu.memory_space<vmem>>, vector<784x48xf32>
    %cst = arith.constant dense<0.000000e+00> : vector<8x48xf32>
    %2 = tpu.matmul %0, %1, %cst {dimension_numbers = #tpu.dot_dimension_numbers<[1], [0], [0], [1], [0, 0, 1, 1], [], []>} : vector<8x784xf32>, vector<784x48xf32>, vector<8x48xf32> -> vector<8x48xf32>
    %c0_3 = arith.constant 0 : index
    %c0_4 = arith.constant 0 : index
    %3 = vector.load %arg3[%c0_3, %c0_4] : memref<1x48xf32, #tpu.memory_space<vmem>>, vector<1x48xf32>
    %4 = vector.broadcast %3 : vector<1x48xf32> to vector<8x48xf32>
    %5 = arith.addf %2, %4 : vector<8x48xf32>
    %cst_5 = arith.constant 0.000000e+00 : f32
    %6 = vector.broadcast %cst_5 : f32 to vector<8x48xf32>
    %7 = arith.maximumf %5, %6 : vector<8x48xf32>
    %c0_6 = arith.constant 0 : index
    %c0_7 = arith.constant 0 : index
    %8 = vector.load %arg4[%c0_6, %c0_7] : memref<48x24xf32, #tpu.memory_space<vmem>>, vector<48x24xf32>
    %cst_8 = arith.constant dense<0.000000e+00> : vector<8x24xf32>
    %9 = tpu.matmul %7, %8, %cst_8 {dimension_numbers = #tpu.dot_dimension_numbers<[1], [0], [0], [1], [0, 0, 1, 1], [], []>} : vector<8x48xf32>, vector<48x24xf32>, vector<8x24xf32> -> vector<8x24xf32>
    %c0_9 = arith.constant 0 : index
    %c0_10 = arith.constant 0 : index
    %10 = vector.load %arg5[%c0_9, %c0_10] : memref<1x24xf32, #tpu.memory_space<vmem>>, vector<1x24xf32>
    %11 = vector.broadcast %10 : vector<1x24xf32> to vector<8x24xf32>
    %12 = arith.addf %9, %11 : vector<8x24xf32>
    %cst_11 = arith.constant 0.000000e+00 : f32
    %13 = vector.broadcast %cst_11 : f32 to vector<8x24xf32>
    %14 = arith.maximumf %12, %13 : vector<8x24xf32>
    %c0_12 = arith.constant 0 : index
    %c0_13 = arith.constant 0 : index
    %15 = vector.load %arg6[%c0_12, %c0_13] : memref<24x128xf32, #tpu.memory_space<vmem>>, vector<24x128xf32>
    %cst_14 = arith.constant dense<0.000000e+00> : vector<8x128xf32>
    %16 = tpu.matmul %14, %15, %cst_14 {dimension_numbers = #tpu.dot_dimension_numbers<[1], [0], [0], [1], [0, 0, 1, 1], [], []>} : vector<8x24xf32>, vector<24x128xf32>, vector<8x128xf32> -> vector<8x128xf32>
    %c0_15 = arith.constant 0 : index
    %c0_16 = arith.constant 0 : index
    %17 = vector.load %arg7[%c0_15, %c0_16] : memref<1x128xf32, #tpu.memory_space<vmem>>, vector<1x128xf32>
    %18 = vector.broadcast %17 : vector<1x128xf32> to vector<8x128xf32>
    %19 = arith.addf %16, %18 : vector<8x128xf32>
    %c0_17 = arith.constant 0 : index
    %c0_18 = arith.constant 0 : index
    %20 = vector.load %arg8[%c0_17, %c0_18] : memref<8x128xf32, #tpu.memory_space<vmem>>, vector<8x128xf32>
    tpu.vector_store %arg8[%c0_17, %c0_18], %19 {strides = array<i32>} : memref<8x128xf32, #tpu.memory_space<vmem>>, vector<8x128xf32>,
    return
  }
  func.func @transform_0(%arg0: i32) -> (i32, i32) {
    %c0_i32 = arith.constant 0 : i32
    %c0_i32_0 = arith.constant 0 : i32
    return %arg0, %c0_i32 : i32, i32
  }
  func.func @transform_1(%arg0: i32) -> (i32, i32) {
    %c0_i32 = arith.constant 0 : i32
    %c0_i32_0 = arith.constant 0 : i32
    %c0_i32_1 = arith.constant 0 : i32
    return %c0_i32, %c0_i32_0 : i32, i32
  }
  func.func @transform_2(%arg0: i32) -> (i32, i32) {
    %c0_i32 = arith.constant 0 : i32
    %c0_i32_0 = arith.constant 0 : i32
    %c0_i32_1 = arith.constant 0 : i32
    return %c0_i32, %c0_i32_0 : i32, i32
  }
  func.func @transform_3(%arg0: i32) -> (i32, i32) {
    %c0_i32 = arith.constant 0 : i32
    %c0_i32_0 = arith.constant 0 : i32
    %c0_i32_1 = arith.constant 0 : i32
    return %c0_i32, %c0_i32_0 : i32, i32
  }
  func.func @transform_4(%arg0: i32) -> (i32, i32) {
    %c0_i32 = arith.constant 0 : i32
    %c0_i32_0 = arith.constant 0 : i32
    %c0_i32_1 = arith.constant 0 : i32
    return %c0_i32, %c0_i32_0 : i32, i32
  }
  func.func @transform_5(%arg0: i32) -> (i32, i32) {
    %c0_i32 = arith.constant 0 : i32
    %c0_i32_0 = arith.constant 0 : i32
    %c0_i32_1 = arith.constant 0 : i32
    return %c0_i32, %c0_i32_0 : i32, i32
  }
  func.func @transform_6(%arg0: i32) -> (i32, i32) {
    %c0_i32 = arith.constant 0 : i32
    %c0_i32_0 = arith.constant 0 : i32
    %c0_i32_1 = arith.constant 0 : i32
    return %c0_i32, %c0_i32_0 : i32, i32
  }
  func.func @transform_7(%arg0: i32) -> (i32, i32) {
    %c0_i32 = arith.constant 0 : i32
    %c0_i32_0 = arith.constant 0 : i32
    return %arg0, %c0_i32 : i32, i32
  }
}

</mosaic_0001>

<llo_original>
// kernel: normalnet_forward.1
$region0: #{normalnet_forward.1}
  #allocation0 [shape = 'u32[]', space=smem, size = 0x4, offset = 0x4, fixed_abs, tag = 'smem constant byte address 0x4 - core index']
  #allocation1 [shape = 'u32[144,128]{1,0:T(1,128)}', space=vmem, size = 0x12000, scoped, tag = 'internal scratch']
  %s0 = inlined_call_operand.vmem [shape: f32[2,784], index: 0, kind: input, shape index: {}]
  %s1 = inlined_call_operand.vmem [shape: f32[784,48], index: 1, kind: input, shape index: {}]
  %s2 = inlined_call_operand.vmem [shape: f32[1,48], index: 2, kind: input, shape index: {}]
  %s3 = inlined_call_operand.vmem [shape: f32[48,24], index: 3, kind: input, shape index: {}]
  %s4 = inlined_call_operand.vmem [shape: f32[1,24], index: 4, kind: input, shape index: {}]
  %s5 = inlined_call_operand.vmem [shape: f32[24,128], index: 5, kind: input, shape index: {}]
  %s6 = inlined_call_operand.vmem [shape: f32[1,128], index: 6, kind: input, shape index: {}]
  %s7 = inlined_call_operand.hbm [shape: f32[2,128], index: 7, kind: output, shape index: {}]
  %s8 = sld [smem:[#allocation0]]
  $region38: #{normalnet_forward.1} parent=0
    _
  %s10 = ssub.s32 1, %s8
  %s11 = scalar_select 0, %s10, %s8
  $region1: #{normalnet_forward.1} parent=0
    #allocation2 [shape = 'u8[4096]{0}', space=vmem, size = 0x1000, scoped, tag = 'output window, operand 0, single buffered']
    #allocation3 [shape = 's32[1]{0}', space=sflag, size = 0x4, scoped, tag = 'scoped memory for normalnet_forward.1']
    %12 = vsyncpa [#allocation3], 0
    // Predicated region
    $region2: #{normalnet_forward.1} parent=1 // pred_check
      _
    $region3: #{normalnet_forward.1} parent=1 // pred_check_branch
      %14 = sbr.rel (0) target = $region5
    $region4: #{normalnet_forward.1} parent=1 // pred_region
      _
    $region5: #{normalnet_forward.1} parent=1 // pred_fallthru
      _
    // Predicated region
    $region6: #{normalnet_forward.1} parent=1 // pred_check
      _
    $region7: #{normalnet_forward.1} parent=1 // pred_check_branch
      %16 = sbr.rel (0) target = $region9
    $region8: #{normalnet_forward.1} parent=1 // pred_region
      _
    $region9: #{normalnet_forward.1} parent=1 // pred_fallthru
      _
    // Predicated region
    $region10: #{normalnet_forward.1} parent=1 // pred_check
      _
    $region11: #{normalnet_forward.1} parent=1 // pred_check_branch
      %18 = sbr.rel (0) target = $region13
    $region12: #{normalnet_forward.1} parent=1 // pred_region
      _
    $region13: #{normalnet_forward.1} parent=1 // pred_fallthru
      _
    // Predicated region
    $region14: #{normalnet_forward.1} parent=1 // pred_check
      _
    $region15: #{normalnet_forward.1} parent=1 // pred_check_branch
      %20 = sbr.rel (0) target = $region17
    $region16: #{normalnet_forward.1} parent=1 // pred_region
      _
    $region17: #{normalnet_forward.1} parent=1 // pred_fallthru
      _
    // Predicated region
    $region18: #{normalnet_forward.1} parent=1 // pred_check
      _
    $region19: #{normalnet_forward.1} parent=1 // pred_check_branch
      %22 = sbr.rel (0) target = $region21
    $region20: #{normalnet_forward.1} parent=1 // pred_region
      _
    $region21: #{normalnet_forward.1} parent=1 // pred_fallthru
      _
    // Predicated region
    $region22: #{normalnet_forward.1} parent=1 // pred_check
      _
    $region23: #{normalnet_forward.1} parent=1 // pred_check_branch
      %24 = sbr.rel (0) target = $region25
    $region24: #{normalnet_forward.1} parent=1 // pred_region
      _
    $region25: #{normalnet_forward.1} parent=1 // pred_fallthru
      _
    // Predicated region
    $region26: #{normalnet_forward.1} parent=1 // pred_check
      _
    $region27: #{normalnet_forward.1} parent=1 // pred_check_branch
      %26 = sbr.rel (0) target = $region29
    $region28: #{normalnet_forward.1} parent=1 // pred_region
      _
    $region29: #{normalnet_forward.1} parent=1 // pred_fallthru
      _
    %v27 = vld [vmem:[%s0] sm:$0xff]
    %v28 = vld [vmem:[%s0 + $0x8] sm:$0x3f]
    %v29 = vld [vmem:[%s0 + $0xe] sm:$0xff]
    %v30 = vld [vmem:[%s0 + $0x16] sm:$0x3f]
    %v31 = vld [vmem:[%s0 + $0x1c] sm:$0xff]
    %v32 = vld [vmem:[%s0 + $0x24] sm:$0x3f]
    %v33 = vld [vmem:[%s0 + $0x2a] sm:$0xff]
    %v34 = vld [vmem:[%s0 + $0x32] sm:$0x3f]
    %v35 = vld [vmem:[%s1] sm:$0xff]
    %v36 = vld [vmem:[%s1 + $0x8] sm:$0xff]
    %v37 = vld [vmem:[%s1 + $0x10] sm:$0xff]
    %v38 = vld [vmem:[%s1 + $0x18] sm:$0xff]
    %v39 = vld [vmem:[%s1 + $0x20] sm:$0xff]
    %v40 = vld [vmem:[%s1 + $0x28] sm:$0xff]
    %v41 = vld [vmem:[%s1 + $0x30] sm:$0xff]
    %v42 = vld [vmem:[%s1 + $0x38] sm:$0xff]
    %v43 = vld [vmem:[%s1 + $0x40] sm:$0xff]
    %v44 = vld [vmem:[%s1 + $0x48] sm:$0xff]
    %v45 = vld [vmem:[%s1 + $0x50] sm:$0xff]
    %v46 = vld [vmem:[%s1 + $0x58] sm:$0xff]
    %v47 = vld [vmem:[%s1 + $0x60] sm:$0xff]
    %v48 = vld [vmem:[%s1 + $0x68] sm:$0xff]
    %v49 = vld [vmem:[%s1 + $0x70] sm:$0xff]
    %v50 = vld [vmem:[%s1 + $0x78] sm:$0xff]
    %v51 = vld [vmem:[%s1 + $0x80] sm:$0xff]
    %v52 = vld [vmem:[%s1 + $0x88] sm:$0xff]
    %v53 = vld [vmem:[%s1 + $0x90] sm:$0xff]
    %v54 = vld [vmem:[%s1 + $0x98] sm:$0xff]
    %v55 = vld [vmem:[%s1 + $0xa0] sm:$0xff]
    %v56 = vld [vmem:[%s1 + $0xa8] sm:$0xff]
    %v57 = vld [vmem:[%s1 + $0xb0] sm:$0xff]
    %v58 = vld [vmem:[%s1 + $0xb8] sm:$0xff]
    %v59 = vld [vmem:[%s1 + $0xc0] sm:$0xff]
    %v60 = vld [vmem:[%s1 + $0xc8] sm:$0xff]
    %v61 = vld [vmem:[%s1 + $0xd0] sm:$0xff]
    %v62 = vld [vmem:[%s1 + $0xd8] sm:$0xff]
    %v63 = vld [vmem:[%s1 + $0xe0] sm:$0xff]
    %v64 = vld [vmem:[%s1 + $0xe8] sm:$0xff]
    %v65 = vld [vmem:[%s1 + $0xf0] sm:$0xff]
    %v66 = vld [vmem:[%s1 + $0xf8] sm:$0xff]
    %v67 = vld [vmem:[%s1 + $0x100] sm:$0xff]
    %v68 = vld [vmem:[%s1 + $0x108] sm:$0xff]
    %v69 = vld [vmem:[%s1 + $0x110] sm:$0xff]
    %v70 = vld [vmem:[%s1 + $0x118] sm:$0xff]
    %v71 = vld [vmem:[%s1 + $0x120] sm:$0xff]
    %v72 = vld [vmem:[%s1 + $0x128] sm:$0xff]
    %v73 = vld [vmem:[%s1 + $0x130] sm:$0xff]
    %v74 = vld [vmem:[%s1 + $0x138] sm:$0xff]
    %v75 = vld [vmem:[%s1 + $0x140] sm:$0xff]
    %v76 = vld [vmem:[%s1 + $0x148] sm:$0xff]
    %v77 = vld [vmem:[%s1 + $0x150] sm:$0xff]
    %v78 = vld [vmem:[%s1 + $0x158] sm:$0xff]
    %v79 = vld [vmem:[%s1 + $0x160] sm:$0xff]
    %v80 = vld [vmem:[%s1 + $0x168] sm:$0xff]
    %v81 = vld [vmem:[%s1 + $0x170] sm:$0xff]
    %v82 = vld [vmem:[%s1 + $0x178] sm:$0xff]
    %v83 = vld [vmem:[%s1 + $0x180] sm:$0xff]
    %v84 = vld [vmem:[%s1 + $0x188] sm:$0xff]
    %v85 = vld [vmem:[%s1 + $0x190] sm:$0xff]
    %v86 = vld [vmem:[%s1 + $0x198] sm:$0xff]
    %v87 = vld [vmem:[%s1 + $0x1a0] sm:$0xff]
    %v88 = vld [vmem:[%s1 + $0x1a8] sm:$0xff]
    %v89 = vld [vmem:[%s1 + $0x1b0] sm:$0xff]
    %v90 = vld [vmem:[%s1 + $0x1b8] sm:$0xff]
    %v91 = vld [vmem:[%s1 + $0x1c0] sm:$0xff]
    %v92 = vld [vmem:[%s1 + $0x1c8] sm:$0xff]
    %v93 = vld [vmem:[%s1 + $0x1d0] sm:$0xff]
    %v94 = vld [vmem:[%s1 + $0x1d8] sm:$0xff]
    %v95 = vld [vmem:[%s1 + $0x1e0] sm:$0xff]
    %v96 = vld [vmem:[%s1 + $0x1e8] sm:$0xff]
    %v97 = vld [vmem:[%s1 + $0x1f0] sm:$0xff]
    %v98 = vld [vmem:[%s1 + $0x1f8] sm:$0xff]
    %v99 = vld [vmem:[%s1 + $0x200] sm:$0xff]
    %v100 = vld [vmem:[%s1 + $0x208] sm:$0xff]
    %v101 = vld [vmem:[%s1 + $0x210] sm:$0xff]
    %v102 = vld [vmem:[%s1 + $0x218] sm:$0xff]
    %v103 = vld [vmem:[%s1 + $0x220] sm:$0xff]
    %v104 = vld [vmem:[%s1 + $0x228] sm:$0xff]
    %v105 = vld [vmem:[%s1 + $0x230] sm:$0xff]
    %v106 = vld [vmem:[%s1 + $0x238] sm:$0xff]
    %v107 = vld [vmem:[%s1 + $0x240] sm:$0xff]
    %v108 = vld [vmem:[%s1 + $0x248] sm:$0xff]
    %v109 = vld [vmem:[%s1 + $0x250] sm:$0xff]
    %v110 = vld [vmem:[%s1 + $0x258] sm:$0xff]
    %v111 = vld [vmem:[%s1 + $0x260] sm:$0xff]
    %v112 = vld [vmem:[%s1 + $0x268] sm:$0xff]
    %v113 = vld [vmem:[%s1 + $0x270] sm:$0xff]
    %v114 = vld [vmem:[%s1 + $0x278] sm:$0xff]
    %v115 = vld [vmem:[%s1 + $0x280] sm:$0xff]
    %v116 = vld [vmem:[%s1 + $0x288] sm:$0xff]
    %v117 = vld [vmem:[%s1 + $0x290] sm:$0xff]
    %v118 = vld [vmem:[%s1 + $0x298] sm:$0xff]
    %v119 = vld [vmem:[%s1 + $0x2a0] sm:$0xff]
    %v120 = vld [vmem:[%s1 + $0x2a8] sm:$0xff]
    %v121 = vld [vmem:[%s1 + $0x2b0] sm:$0xff]
    %v122 = vld [vmem:[%s1 + $0x2b8] sm:$0xff]
    %v123 = vld [vmem:[%s1 + $0x2c0] sm:$0xff]
    %v124 = vld [vmem:[%s1 + $0x2c8] sm:$0xff]
    %v125 = vld [vmem:[%s1 + $0x2d0] sm:$0xff]
    %v126 = vld [vmem:[%s1 + $0x2d8] sm:$0xff]
    %v127 = vld [vmem:[%s1 + $0x2e0] sm:$0xff]
    %v128 = vld [vmem:[%s1 + $0x2e8] sm:$0xff]
    %v129 = vld [vmem:[%s1 + $0x2f0] sm:$0xff]
    %v130 = vld [vmem:[%s1 + $0x2f8] sm:$0xff]
    %v131 = vld [vmem:[%s1 + $0x300] sm:$0xff]
    %v132 = vld [vmem:[%s1 + $0x308] sm:$0xff]
    %v133 = vld [vmem:[%s2] sm:$0x1]
    %v135 = vlaneseq
    %v136 = vshrl.u32 %v135, 7
    %v137 = vsub.s32 0, %v136
    %v138 = vrot.slane %v133, %v137
    %v148 = vcombine.low %v27, %v29
    %v149 = vcombine.high %v27, %v29
    %v150 = vcombine.low %v31, %v33
    %v151 = vcombine.high %v31, %v33
    %v153 = vunpack.c.l.s4 1983009808
    %v154 = vunpack.c.0.s8 %v153
    %v155 = vlaneseq
    %v156 = vshrl.u32 %v155, 7
    %v157 = vsub.s32 %v154, %v156
    %v158 = vrot.slane %v148, %v157
    %v160 = vunpack.c.l.s4 1983009808
    %v161 = vunpack.c.0.s8 %v160
    %v162 = vlaneseq
    %v163 = vshrl.u32 %v162, 7
    %v164 = vsub.s32 %v161, %v163
    %v165 = vrot.slane %v149, %v164
    %v167 = vunpack.c.l.s4 1983009808
    %v168 = vunpack.c.0.s8 %v167
    %v169 = vlaneseq
    %v170 = vshrl.u32 %v169, 7
    %v171 = vsub.s32 %v168, %v170
    %v172 = vrot.slane %v150, %v171
    %v174 = vunpack.c.l.s4 1983009808
    %v175 = vunpack.c.0.s8 %v174
    %v176 = vlaneseq
    %v177 = vshrl.u32 %v176, 7
    %v178 = vsub.s32 %v175, %v177
    %v179 = vrot.slane %v151, %v178
    %v180 = vcombine.low %v158, %v172
    %v181 = vcombine.high %v158, %v172
    %v182 = vcombine.low %v165, %v179
    %v183 = vcombine.high %v165, %v179
    %v184 = vcombine.low %v28, %v30
    %v185 = vcombine.high %v28, %v30
    %v186 = vcombine.low %v32, %v34
    %v187 = vcombine.high %v32, %v34
    %v189 = vunpack.c.l.s4 1983009808
    %v190 = vunpack.c.0.s8 %v189
    %v191 = vlaneseq
    %v192 = vshrl.u32 %v191, 7
    %v193 = vsub.s32 %v190, %v192
    %v194 = vrot.slane %v184, %v193
    %v196 = vunpack.c.l.s4 1983009808
    %v197 = vunpack.c.0.s8 %v196
    %v198 = vlaneseq
    %v199 = vshrl.u32 %v198, 7
    %v200 = vsub.s32 %v197, %v199
    %v201 = vrot.slane %v185, %v200
    %v203 = vunpack.c.l.s4 1983009808
    %v204 = vunpack.c.0.s8 %v203
    %v205 = vlaneseq
    %v206 = vshrl.u32 %v205, 7
    %v207 = vsub.s32 %v204, %v206
    %v208 = vrot.slane %v186, %v207
    %v210 = vunpack.c.l.s4 1983009808
    %v211 = vunpack.c.0.s8 %v210
    %v212 = vlaneseq
    %v213 = vshrl.u32 %v212, 7
    %v214 = vsub.s32 %v211, %v213
    %v215 = vrot.slane %v187, %v214
    %v216 = vcombine.low %v194, %v208
    %v217 = vcombine.high %v194, %v208
    %v218 = vcombine.low %v201, %v215
    %vm225 = vcmask 130048
    %v226 = vsel %vm225, %v218, 0
    %228 = vmatprep.subr.mxu0 0.0
    %229 = vmatpush1.msra.mxu0 %v35
    %230 = vmatprep.subr.mxu0 0.0
    %231 = vmatpush1.msra.mxu0 %v36
    %232 = vmatprep.subr.mxu0 0.0
    %233 = vmatpush1.msra.mxu0 %v37
    %234 = vmatprep.subr.mxu0 0.0
    %235 = vmatpush1.msra.mxu0 %v38
    %236 = vmatprep.subr.mxu0 0.0
    %237 = vmatpush1.msra.mxu0 %v39
    %238 = vmatprep.subr.mxu0 0.0
    %239 = vmatpush1.msra.mxu0 %v40
    %240 = vmatprep.subr.mxu0 0.0
    %241 = vmatpush1.msra.mxu0 %v41
    %242 = vmatprep.subr.mxu0 0.0
    %243 = vmatpush1.msra.mxu0 %v42
    %244 = vmatprep.subr.mxu0 0.0
    %245 = vmatpush1.msra.mxu0 %v43
    %246 = vmatprep.subr.mxu0 0.0
    %247 = vmatpush1.msra.mxu0 %v44
    %248 = vmatprep.subr.mxu0 0.0
    %249 = vmatpush1.msra.mxu0 %v45
    %250 = vmatprep.subr.mxu0 0.0
    %251 = vmatpush1.msra.mxu0 %v46
    %252 = vmatprep.subr.mxu0 0.0
    %253 = vmatpush1.msra.mxu0 %v47
    %254 = vmatprep.subr.mxu0 0.0
    %255 = vmatpush1.msra.mxu0 %v48
    %256 = vmatprep.subr.mxu0 0.0
    %257 = vmatpush1.msra.mxu0 %v49
    %258 = vmatprep.subr.mxu0 0.0
    %259 = vmatpush1.msra.mxu0 %v50
    %260 = vmatprep.subr.mxu0 0.0
    %261 = vmatpush1.msra.mxu0 %v51
    %262 = vmatprep.subr.mxu0 0.0
    %263 = vmatpush1.msra.mxu0 %v52
    %264 = vmatprep.subr.mxu0 0.0
    %265 = vmatpush1.msra.mxu0 %v53
    %266 = vmatprep.subr.mxu0 0.0
    %267 = vmatpush1.msra.mxu0 %v54
    %268 = vmatprep.subr.mxu0 0.0
    %269 = vmatpush1.msra.mxu0 %v55
    %270 = vmatprep.subr.mxu0 0.0
    %271 = vmatpush1.msra.mxu0 %v56
    %272 = vmatprep.subr.mxu0 0.0
    %273 = vmatpush1.msra.mxu0 %v57
    %274 = vmatprep.subr.mxu0 0.0
    %275 = vmatpush1.msra.mxu0 %v58
    %276 = vmatprep.subr.mxu0 0.0
    %277 = vmatpush1.msra.mxu0 %v59
    %278 = vmatprep.subr.mxu0 0.0
    %279 = vmatpush1.msra.mxu0 %v60
    %280 = vmatprep.subr.mxu0 0.0
    %281 = vmatpush1.msra.mxu0 %v61
    %282 = vmatprep.subr.mxu0 0.0
    %283 = vmatpush1.msra.mxu0 %v62
    %284 = vmatprep.subr.mxu0 0.0
    %285 = vmatpush1.msra.mxu0 %v63
    %286 = vmatprep.subr.mxu0 0.0
    %287 = vmatpush1.msra.mxu0 %v64
    %288 = vmatprep.subr.mxu0 0.0
    %289 = vmatpush1.msra.mxu0 %v65
    %290 = vmatprep.subr.mxu0 0.0
    %291 = vmatpush1.msra.mxu0 %v66
    %292 = vmatprep.mubr.f32.mxu0 %v181
    %293 = vmatmul.mubr.f32.gmra.mrb[0].mxu0 %v180
    %v294 = vpop.f32.mrb[0].mxu0
    %v295 = vadd.f32 %v138, %v294
    %v296 = vpop.f32.mrb[0].mxu0
    %297 = vdwg.mxu0
    %298 = vmatprep.subr.mxu0 0.0
    %299 = vmatpush1.msra.mxu0 %v67
    %300 = vmatprep.subr.mxu0 0.0
    %301 = vmatpush1.msra.mxu0 %v68
    %302 = vmatprep.subr.mxu0 0.0
    %303 = vmatpush1.msra.mxu0 %v69
    %304 = vmatprep.subr.mxu0 0.0
    %305 = vmatpush1.msra.mxu0 %v70
    %306 = vmatprep.subr.mxu0 0.0
    %307 = vmatpush1.msra.mxu0 %v71
    %308 = vmatprep.subr.mxu0 0.0
    %309 = vmatpush1.msra.mxu0 %v72
    %310 = vmatprep.subr.mxu0 0.0
    %311 = vmatpush1.msra.mxu0 %v73
    %312 = vmatprep.subr.mxu0 0.0
    %313 = vmatpush1.msra.mxu0 %v74
    %314 = vmatprep.subr.mxu0 0.0
    %315 = vmatpush1.msra.mxu0 %v75
    %316 = vmatprep.subr.mxu0 0.0
    %317 = vmatpush1.msra.mxu0 %v76
    %318 = vmatprep.subr.mxu0 0.0
    %319 = vmatpush1.msra.mxu0 %v77
    %320 = vmatprep.subr.mxu0 0.0
    %321 = vmatpush1.msra.mxu0 %v78
    %322 = vmatprep.subr.mxu0 0.0
    %323 = vmatpush1.msra.mxu0 %v79
    %324 = vmatprep.subr.mxu0 0.0
    %325 = vmatpush1.msra.mxu0 %v80
    %326 = vmatprep.subr.mxu0 0.0
    %327 = vmatpush1.msra.mxu0 %v81
    %328 = vmatprep.subr.mxu0 0.0
    %329 = vmatpush1.msra.mxu0 %v82
    %330 = vmatprep.subr.mxu0 0.0
    %331 = vmatpush1.msra.mxu0 %v83
    %332 = vmatprep.subr.mxu0 0.0
    %333 = vmatpush1.msra.mxu0 %v84
    %334 = vmatprep.subr.mxu0 0.0
    %335 = vmatpush1.msra.mxu0 %v85
    %336 = vmatprep.subr.mxu0 0.0
    %337 = vmatpush1.msra.mxu0 %v86
    %338 = vmatprep.subr.mxu0 0.0
    %339 = vmatpush1.msra.mxu0 %v87
    %340 = vmatprep.subr.mxu0 0.0
    %341 = vmatpush1.msra.mxu0 %v88
    %342 = vmatprep.subr.mxu0 0.0
    %343 = vmatpush1.msra.mxu0 %v89
    %344 = vmatprep.subr.mxu0 0.0
    %345 = vmatpush1.msra.mxu0 %v90
    %346 = vmatprep.subr.mxu0 0.0
    %347 = vmatpush1.msra.mxu0 %v91
    %348 = vmatprep.subr.mxu0 0.0
    %349 = vmatpush1.msra.mxu0 %v92
    %350 = vmatprep.subr.mxu0 0.0
    %351 = vmatpush1.msra.mxu0 %v93
    %352 = vmatprep.subr.mxu0 0.0
    %353 = vmatpush1.msra.mxu0 %v94
    %354 = vmatprep.subr.mxu0 0.0
    %355 = vmatpush1.msra.mxu0 %v95
    %356 = vmatprep.subr.mxu0 0.0
    %357 = vmatpush1.msra.mxu0 %v96
    %358 = vmatprep.subr.mxu0 0.0
    %359 = vmatpush1.msra.mxu0 %v97
    %360 = vmatprep.subr.mxu0 0.0
    %361 = vmatpush1.msra.mxu0 %v98
    %362 = vmatprep.mubr.f32.mxu0 %v183
    %363 = vmatmul.mubr.f32.gmra.mrb[0].mxu0 %v182
    %v364 = vpop.f32.mrb[0].mxu0
    %v365 = vadd.f32 %v295, %v364
    %v366 = vpop.f32.mrb[0].mxu0
    %367 = vdwg.mxu0
    %368 = vmatprep.subr.mxu0 0.0
    %369 = vmatpush1.msra.mxu0 %v99
    %370 = vmatprep.subr.mxu0 0.0
    %371 = vmatpush1.msra.mxu0 %v100
    %372 = vmatprep.subr.mxu0 0.0
    %373 = vmatpush1.msra.mxu0 %v101
    %374 = vmatprep.subr.mxu0 0.0
    %375 = vmatpush1.msra.mxu0 %v102
    %376 = vmatprep.subr.mxu0 0.0
    %377 = vmatpush1.msra.mxu0 %v103
    %378 = vmatprep.subr.mxu0 0.0
    %379 = vmatpush1.msra.mxu0 %v104
    %380 = vmatprep.subr.mxu0 0.0
    %381 = vmatpush1.msra.mxu0 %v105
    %382 = vmatprep.subr.mxu0 0.0
    %383 = vmatpush1.msra.mxu0 %v106
    %384 = vmatprep.subr.mxu0 0.0
    %385 = vmatpush1.msra.mxu0 %v107
    %386 = vmatprep.subr.mxu0 0.0
    %387 = vmatpush1.msra.mxu0 %v108
    %388 = vmatprep.subr.mxu0 0.0
    %389 = vmatpush1.msra.mxu0 %v109
    %390 = vmatprep.subr.mxu0 0.0
    %391 = vmatpush1.msra.mxu0 %v110
    %392 = vmatprep.subr.mxu0 0.0
    %393 = vmatpush1.msra.mxu0 %v111
    %394 = vmatprep.subr.mxu0 0.0
    %395 = vmatpush1.msra.mxu0 %v112
    %396 = vmatprep.subr.mxu0 0.0
    %397 = vmatpush1.msra.mxu0 %v113
    %398 = vmatprep.subr.mxu0 0.0
    %399 = vmatpush1.msra.mxu0 %v114
    %400 = vmatprep.subr.mxu0 0.0
    %401 = vmatpush1.msra.mxu0 %v115
    %402 = vmatprep.subr.mxu0 0.0
    %403 = vmatpush1.msra.mxu0 %v116
    %404 = vmatprep.subr.mxu0 0.0
    %405 = vmatpush1.msra.mxu0 %v117
    %406 = vmatprep.subr.mxu0 0.0
    %407 = vmatpush1.msra.mxu0 %v118
    %408 = vmatprep.subr.mxu0 0.0
    %409 = vmatpush1.msra.mxu0 %v119
    %410 = vmatprep.subr.mxu0 0.0
    %411 = vmatpush1.msra.mxu0 %v120
    %412 = vmatprep.subr.mxu0 0.0
    %413 = vmatpush1.msra.mxu0 %v121
    %414 = vmatprep.subr.mxu0 0.0
    %415 = vmatpush1.msra.mxu0 %v122
    %416 = vmatprep.subr.mxu0 0.0
    %417 = vmatpush1.msra.mxu0 %v123
    %418 = vmatprep.subr.mxu0 0.0
    %419 = vmatpush1.msra.mxu0 %v124
    %420 = vmatprep.subr.mxu0 0.0
    %421 = vmatpush1.msra.mxu0 %v125
    %422 = vmatprep.subr.mxu0 0.0
    %423 = vmatpush1.msra.mxu0 %v126
    %424 = vmatprep.subr.mxu0 0.0
    %425 = vmatpush1.msra.mxu0 %v127
    %426 = vmatprep.subr.mxu0 0.0
    %427 = vmatpush1.msra.mxu0 %v128
    %428 = vmatprep.subr.mxu0 0.0
    %429 = vmatpush1.msra.mxu0 %v129
    %430 = vmatprep.subr.mxu0 0.0
    %431 = vmatpush1.msra.mxu0 %v130
    %432 = vmatprep.mubr.f32.mxu0 %v217
    %433 = vmatmul.mubr.f32.gmra.mrb[0].mxu0 %v216
    %v434 = vpop.f32.mrb[0].mxu0
    %v435 = vadd.f32 %v365, %v434
    %v436 = vpop.f32.mrb[0].mxu0
    %437 = vdwg.mxu0
    %438 = vmatprep.subr.mxu0 0.0
    %439 = vmatpush1.msra.mxu0 %v131
    %440 = vmatprep.subr.mxu0 0.0
    %441 = vmatpush1.msra.mxu0 %v132
    %442 = vmatprep.subr.mxu0 0.0
    %443 = vmatpush1.msra.mxu0 0.0
    %444 = vmatprep.subr.mxu0 0.0
    %445 = vmatpush1.msra.mxu0 0.0
    %446 = vmatprep.subr.mxu0 0.0
    %447 = vmatpush1.msra.mxu0 0.0
    %448 = vmatprep.subr.mxu0 0.0
    %449 = vmatpush1.msra.mxu0 0.0
    %450 = vmatprep.subr.mxu0 0.0
    %451 = vmatpush1.msra.mxu0 0.0
    %452 = vmatprep.subr.mxu0 0.0
    %453 = vmatpush1.msra.mxu0 0.0
    %454 = vmatprep.subr.mxu0 0.0
    %455 = vmatpush1.msra.mxu0 0.0
    %456 = vmatprep.subr.mxu0 0.0
    %457 = vmatpush1.msra.mxu0 0.0
    %458 = vmatprep.subr.mxu0 0.0
    %459 = vmatpush1.msra.mxu0 0.0
    %460 = vmatprep.subr.mxu0 0.0
    %461 = vmatpush1.msra.mxu0 0.0
    %462 = vmatprep.subr.mxu0 0.0
    %463 = vmatpush1.msra.mxu0 0.0
    %464 = vmatprep.subr.mxu0 0.0
    %465 = vmatpush1.msra.mxu0 0.0
    %466 = vmatprep.subr.mxu0 0.0
    %467 = vmatpush1.msra.mxu0 0.0
    %468 = vmatprep.subr.mxu0 0.0
    %469 = vmatpush1.msra.mxu0 0.0
    %470 = vmatprep.subr.mxu0 0.0
    %471 = vmatpush1.msra.mxu0 0.0
    %472 = vmatprep.subr.mxu0 0.0
    %473 = vmatpush1.msra.mxu0 0.0
    %474 = vmatprep.subr.mxu0 0.0
    %475 = vmatpush1.msra.mxu0 0.0
    %476 = vmatprep.subr.mxu0 0.0
    %477 = vmatpush1.msra.mxu0 0.0
    %478 = vmatprep.subr.mxu0 0.0
    %479 = vmatpush1.msra.mxu0 0.0
    %480 = vmatprep.subr.mxu0 0.0
    %481 = vmatpush1.msra.mxu0 0.0
    %482 = vmatprep.subr.mxu0 0.0
    %483 = vmatpush1.msra.mxu0 0.0
    %484 = vmatprep.subr.mxu0 0.0
    %485 = vmatpush1.msra.mxu0 0.0
    %486 = vmatprep.subr.mxu0 0.0
    %487 = vmatpush1.msra.mxu0 0.0
    %488 = vmatprep.subr.mxu0 0.0
    %489 = vmatpush1.msra.mxu0 0.0
    %490 = vmatprep.subr.mxu0 0.0
    %491 = vmatpush1.msra.mxu0 0.0
    %492 = vmatprep.subr.mxu0 0.0
    %493 = vmatpush1.msra.mxu0 0.0
    %494 = vmatprep.subr.mxu0 0.0
    %495 = vmatpush1.msra.mxu0 0.0
    %496 = vmatprep.subr.mxu0 0.0
    %497 = vmatpush1.msra.mxu0 0.0
    %498 = vmatprep.subr.mxu0 0.0
    %499 = vmatpush1.msra.mxu0 0.0
    %500 = vmatprep.subr.mxu0 0.0
    %501 = vmatpush1.msra.mxu0 0.0
    %502 = vmatprep.mubr.f32.mxu0 0.0
    %503 = vmatmul.mubr.f32.gmra.mrb[0].mxu0 %v226
    %v504 = vpop.f32.mrb[0].mxu0
    %v505 = vadd.f32 %v435, %v504
    %v506 = vpop.f32.mrb[0].mxu0
    %507 = vdwg.mxu0
    %v508 = vmax.f32 %v505, 0.0
    %v509 = vld [vmem:[%s3] sm:$0xff]
    %v510 = vld [vmem:[%s3 + $0x8] sm:$0xff]
    %v511 = vld [vmem:[%s3 + $0x10] sm:$0xff]
    %v512 = vld [vmem:[%s3 + $0x18] sm:$0xff]
    %v513 = vld [vmem:[%s3 + $0x20] sm:$0xff]
    %v514 = vld [vmem:[%s3 + $0x28] sm:$0xff]
    %v515 = vld [vmem:[%s4] sm:$0x1]
    %v517 = vlaneseq
    %v518 = vshrl.u32 %v517, 7
    %v519 = vsub.s32 0, %v518
    %v520 = vrot.slane %v515, %v519
    %vm522 = vcmask 392192
    %v524 = vsel %vm522, %v508, 0
    %526 = vmatprep.subr.mxu0 0.0
    %527 = vmatpush1.msra.mxu0 %v509
    %528 = vmatprep.subr.mxu0 0.0
    %529 = vmatpush1.msra.mxu0 %v510
    %530 = vmatprep.subr.mxu0 0.0
    %531 = vmatpush1.msra.mxu0 %v511
    %532 = vmatprep.subr.mxu0 0.0
    %533 = vmatpush1.msra.mxu0 %v512
    %534 = vmatprep.subr.mxu0 0.0
    %535 = vmatpush1.msra.mxu0 %v513
    %536 = vmatprep.subr.mxu0 0.0
    %537 = vmatpush1.msra.mxu0 %v514
    %538 = vmatprep.subr.mxu0 0.0
    %539 = vmatpush1.msra.mxu0 0.0
    %540 = vmatprep.subr.mxu0 0.0
    %541 = vmatpush1.msra.mxu0 0.0
    %542 = vmatprep.subr.mxu0 0.0
    %543 = vmatpush1.msra.mxu0 0.0
    %544 = vmatprep.subr.mxu0 0.0
    %545 = vmatpush1.msra.mxu0 0.0
    %546 = vmatprep.subr.mxu0 0.0
    %547 = vmatpush1.msra.mxu0 0.0
    %548 = vmatprep.subr.mxu0 0.0
    %549 = vmatpush1.msra.mxu0 0.0
    %550 = vmatprep.subr.mxu0 0.0
    %551 = vmatpush1.msra.mxu0 0.0
    %552 = vmatprep.subr.mxu0 0.0
    %553 = vmatpush1.msra.mxu0 0.0
    %554 = vmatprep.subr.mxu0 0.0
    %555 = vmatpush1.msra.mxu0 0.0
    %556 = vmatprep.subr.mxu0 0.0
    %557 = vmatpush1.msra.mxu0 0.0
    %558 = vmatprep.subr.mxu0 0.0
    %559 = vmatpush1.msra.mxu0 0.0
    %560 = vmatprep.subr.mxu0 0.0
    %561 = vmatpush1.msra.mxu0 0.0
    %562 = vmatprep.subr.mxu0 0.0
    %563 = vmatpush1.msra.mxu0 0.0
    %564 = vmatprep.subr.mxu0 0.0
    %565 = vmatpush1.msra.mxu0 0.0
    %566 = vmatprep.subr.mxu0 0.0
    %567 = vmatpush1.msra.mxu0 0.0
    %568 = vmatprep.subr.mxu0 0.0
    %569 = vmatpush1.msra.mxu0 0.0
    %570 = vmatprep.subr.mxu0 0.0
    %571 = vmatpush1.msra.mxu0 0.0
    %572 = vmatprep.subr.mxu0 0.0
    %573 = vmatpush1.msra.mxu0 0.0
    %574 = vmatprep.subr.mxu0 0.0
    %575 = vmatpush1.msra.mxu0 0.0
    %576 = vmatprep.subr.mxu0 0.0
    %577 = vmatpush1.msra.mxu0 0.0
    %578 = vmatprep.subr.mxu0 0.0
    %579 = vmatpush1.msra.mxu0 0.0
    %580 = vmatprep.subr.mxu0 0.0
    %581 = vmatpush1.msra.mxu0 0.0
    %582 = vmatprep.subr.mxu0 0.0
    %583 = vmatpush1.msra.mxu0 0.0
    %584 = vmatprep.subr.mxu0 0.0
    %585 = vmatpush1.msra.mxu0 0.0
    %586 = vmatprep.subr.mxu0 0.0
    %587 = vmatpush1.msra.mxu0 0.0
    %588 = vmatprep.subr.mxu0 0.0
    %589 = vmatpush1.msra.mxu0 0.0
    %590 = vmatprep.mubr.f32.mxu0 0.0
    %591 = vmatmul.mubr.f32.gmra.mrb[0].mxu0 %v524
    %v592 = vpop.f32.mrb[0].mxu0
    %v593 = vadd.f32 %v520, %v592
    %v594 = vpop.f32.mrb[0].mxu0
    %595 = vdwg.mxu0
    %v596 = vmax.f32 %v593, 0.0
    %v597 = vld [vmem:[%s5] sm:$0xff]
    %v598 = vld [vmem:[%s5 + $0x8] sm:$0xff]
    %v599 = vld [vmem:[%s5 + $0x10] sm:$0xff]
    %v600 = vld [vmem:[%s6] sm:$0x1]
    %v602 = vlaneseq
    %v603 = vshrl.u32 %v602, 7
    %v604 = vsub.s32 0, %v603
    %v605 = vrot.slane %v600, %v604
    %vm607 = vcmask 195584
    %v609 = vsel %vm607, %v596, 0
    %611 = vmatprep.subr.mxu0 0.0
    %612 = vmatpush1.msra.mxu0 %v597
    %613 = vmatprep.subr.mxu0 0.0
    %614 = vmatpush1.msra.mxu0 %v598
    %615 = vmatprep.subr.mxu0 0.0
    %616 = vmatpush1.msra.mxu0 %v599
    %617 = vmatprep.subr.mxu0 0.0
    %618 = vmatpush1.msra.mxu0 0.0
    %619 = vmatprep.subr.mxu0 0.0
    %620 = vmatpush1.msra.mxu0 0.0
    %621 = vmatprep.subr.mxu0 0.0
    %622 = vmatpush1.msra.mxu0 0.0
    %623 = vmatprep.subr.mxu0 0.0
    %624 = vmatpush1.msra.mxu0 0.0
    %625 = vmatprep.subr.mxu0 0.0
    %626 = vmatpush1.msra.mxu0 0.0
    %627 = vmatprep.subr.mxu0 0.0
    %628 = vmatpush1.msra.mxu0 0.0
    %629 = vmatprep.subr.mxu0 0.0
    %630 = vmatpush1.msra.mxu0 0.0
    %631 = vmatprep.subr.mxu0 0.0
    %632 = vmatpush1.msra.mxu0 0.0
    %633 = vmatprep.subr.mxu0 0.0
    %634 = vmatpush1.msra.mxu0 0.0
    %635 = vmatprep.subr.mxu0 0.0
    %636 = vmatpush1.msra.mxu0 0.0
    %637 = vmatprep.subr.mxu0 0.0
    %638 = vmatpush1.msra.mxu0 0.0
    %639 = vmatprep.subr.mxu0 0.0
    %640 = vmatpush1.msra.mxu0 0.0
    %641 = vmatprep.subr.mxu0 0.0
    %642 = vmatpush1.msra.mxu0 0.0
    %643 = vmatprep.subr.mxu0 0.0
    %644 = vmatpush1.msra.mxu0 0.0
    %645 = vmatprep.subr.mxu0 0.0
    %646 = vmatpush1.msra.mxu0 0.0
    %647 = vmatprep.subr.mxu0 0.0
    %648 = vmatpush1.msra.mxu0 0.0
    %649 = vmatprep.subr.mxu0 0.0
    %650 = vmatpush1.msra.mxu0 0.0
    %651 = vmatprep.subr.mxu0 0.0
    %652 = vmatpush1.msra.mxu0 0.0
    %653 = vmatprep.subr.mxu0 0.0
    %654 = vmatpush1.msra.mxu0 0.0
    %655 = vmatprep.subr.mxu0 0.0
    %656 = vmatpush1.msra.mxu0 0.0
    %657 = vmatprep.subr.mxu0 0.0
    %658 = vmatpush1.msra.mxu0 0.0
    %659 = vmatprep.subr.mxu0 0.0
    %660 = vmatpush1.msra.mxu0 0.0
    %661 = vmatprep.subr.mxu0 0.0
    %662 = vmatpush1.msra.mxu0 0.0
    %663 = vmatprep.subr.mxu0 0.0
    %664 = vmatpush1.msra.mxu0 0.0
    %665 = vmatprep.subr.mxu0 0.0
    %666 = vmatpush1.msra.mxu0 0.0
    %667 = vmatprep.subr.mxu0 0.0
    %668 = vmatpush1.msra.mxu0 0.0
    %669 = vmatprep.subr.mxu0 0.0
    %670 = vmatpush1.msra.mxu0 0.0
    %671 = vmatprep.subr.mxu0 0.0
    %672 = vmatpush1.msra.mxu0 0.0
    %673 = vmatprep.subr.mxu0 0.0
    %674 = vmatpush1.msra.mxu0 0.0
    %675 = vmatprep.mubr.f32.mxu0 0.0
    %676 = vmatmul.mubr.f32.gmra.mrb[0].mxu0 %v609
    %v677 = vpop.f32.mrb[0].mxu0
    %v678 = vadd.f32 %v605, %v677
    %v679 = vpop.f32.mrb[0].mxu0
    %680 = vdwg.mxu0
    %681 = vst [vmem:[#allocation2] sm:$0xff] %v678
    // Predicated region
    $region30: #{normalnet_forward.1} parent=1 // pred_check
      _
    $region31: #{normalnet_forward.1} parent=1 // pred_check_branch
      %683 = sbr.rel (0) target = $region33
    $region32: #{normalnet_forward.1} parent=1 // pred_region
      %s685 = ssub.s32 128, 32
      %686 = vsyncadd [#allocation3], %s685
      %s687 = sshll.u32 [#allocation2], 4
      %s688 = int_to_ptr.vmem [resolvable:$true] %s687
      %693 = dma.vmem_to_hbm [thread:$0]  %s688, 32, %s7, [#allocation3], 32, 32, 2
    $region33: #{normalnet_forward.1} parent=1 // pred_fallthru
      _
    // Predicated region
    $region34: #{normalnet_forward.1} parent=1 // pred_check
      _
    $region35: #{normalnet_forward.1} parent=1 // pred_check_branch
      %695 = sbr.rel (0) target = $region37
    $region36: #{normalnet_forward.1} parent=1 // pred_region
      %696 = dma.done [#allocation3], 128
    $region37: #{normalnet_forward.1} parent=1 // pred_fallthru
      _
    %697 = vsyncpa [#allocation3], 1

</llo_original>
